<compile_context>
chip_gen: v7x
topology: tpu7x:2x2x1
jax: 0.10.0
libtpu: 0.0.40
codegen_flags: <defaults>
</compile_context>

<pallas_src>
import jax
import jax.numpy as jnp
from jax.experimental import pallas as pl
from jax.experimental.pallas import tpu as pltpu


def _round_up(x, m):
    return ((x + m - 1) // m) * m


def _sigmoid_kernel(x_ref, o_ref):
    # Always compute in f32: the kernel is HBM-bound on every generation so
    # the EUP/VPU have slack, and v5e has no bf16 vector units anyway.
    x = x_ref[...].astype(jnp.float32)
    # sigmoid(x) == 0.5 * (tanh(0.5 * x) + 1): a single EUP transcendental.
    y = 0.5 * (jnp.tanh(0.5 * x) + 1.0)
    o_ref[...] = y.astype(o_ref.dtype)


def _default_block_bytes():
    # Bigger blocks on v7x to amortize per-grid-step overhead against its
    # 3.2 TB/s HBM; 4 MiB is plenty for v5e/v6e.
    try:
        kind = jax.devices()[0].device_kind.lower()
    except Exception:
        kind = ""
    return (8 if "v7" in kind else 4) * 1024 * 1024


def _pick_flat_width(total):
    for w in (4096, 2048, 1024, 512, 256, 128):
        if total % w == 0:
            return w
    return None


def numerical_activation(logits, *, training=True, target_block_bytes=None):
    """Pallas implementation of NumericalActivation.forward (sigmoid)."""
    del training  # unused, same as the PyTorch module
    assert logits.ndim == 2, "expected (batch, features) logits"
    B, F = logits.shape
    in_dtype = logits.dtype
    # Integer logits would otherwise truncate sigmoid(x) in (0,1) to 0.
    out_dtype = in_dtype if jnp.issubdtype(in_dtype, jnp.floating) else jnp.float32
    in_bytes = jnp.dtype(in_dtype).itemsize
    out_bytes = jnp.dtype(out_dtype).itemsize
    if target_block_bytes is None:
        target_block_bytes = _default_block_bytes()

    # Lane-dense layout for ragged feature widths: if F % 128 != 0 but the
    # flat element count divides a lane-dense width, reshape the contiguous
    # row-major buffer to (rows, W) — metadata only, no HBM copy — so every
    # store is an unmasked full-lane vst and no DMA bandwidth is wasted.
    x = logits
    flat_w = None
    if F % 128 != 0:
        flat_w = _pick_flat_width(B * F)
        if flat_w is not None:
            x = logits.reshape((B * F) // flat_w, flat_w)
    R, C = x.shape

    # Sublane packing requirement of the (wider-packing) input dtype:
    # 8 rows/vreg for 32-bit, 16 for 16-bit, 32 for 8-bit.
    sub = max(8, 32 // in_bytes)

    # Lane-dense block: full (128-padded) width when modest, else 2048 lanes.
    c128 = _round_up(C, 128)
    block_cols = c128 if c128 <= 4096 else 2048

    # Fill rows up to ~target_block_bytes, respecting sublane packing.
    per_row_bytes = block_cols * max(in_bytes, out_bytes)
    rows = max(sub, (target_block_bytes // per_row_bytes) // sub * sub)
    block_rows = min(_round_up(R, sub), rows)

    # No wrapper padding: cdiv grid, Pallas masks the boundary blocks.
    grid_r = pl.cdiv(R, block_rows)
    grid_c = pl.cdiv(C, block_cols)
    # Give v7x's two TensorCores something to share on medium inputs.
    while grid_r * grid_c < 4 and block_rows > sub:
        block_rows = max(sub, (block_rows // 2) // sub * sub)
        grid_r = pl.cdiv(R, block_rows)

    blk = (block_rows, block_cols)
    index_map = lambda i, j: (i, j)

    out = pl.pallas_call(
        _sigmoid_kernel,
        out_shape=jax.ShapeDtypeStruct((R, C), out_dtype),
        grid_spec=pltpu.PrefetchScalarGridSpec(
            num_scalar_prefetch=0,
            grid=(grid_r, grid_c),
            in_specs=[pl.BlockSpec(blk, index_map)],
            out_specs=pl.BlockSpec(blk, index_map),
        ),
        compiler_params=pltpu.CompilerParams(
            dimension_semantics=("parallel", "parallel"),
            # in+out double-buffered = 4x block; stay clear of the 16/32 MiB
            # scoped defaults while leaving headroom under v7x's 64 MiB VMEM.
            vmem_limit_bytes=48 * 1024 * 1024,
        ),
        cost_estimate=pl.CostEstimate(
            flops=4 * R * C,
            transcendentals=R * C,
            bytes_accessed=R * C * (in_bytes + out_bytes),
        ),
    )(x)

    if flat_w is not None:
        out = out.reshape(B, F)
    return out


if __name__ == "__main__":
    key = jax.random.PRNGKey(0)
    k1, k2, k3, k4 = jax.random.split(key, 4)

    # Aligned shape consistent with the module: batch=8, features=256.
    logits = jax.random.normal(k1, (8, 256), dtype=jnp.float32)
    out = jax.block_until_ready(numerical_activation(logits))
    ref = jax.nn.sigmoid(logits)
    assert out.shape == logits.shape and out.dtype == logits.dtype
    assert jnp.max(jnp.abs(out - ref)) < 1e-5

    # Unaligned shape, not lane-flattenable -> cdiv-masked boundary blocks.
    logits2 = jax.random.normal(k2, (5, 200), dtype=jnp.float32)
    out2 = jax.block_until_ready(numerical_activation(logits2))
    ref2 = jax.nn.sigmoid(logits2)
    assert out2.shape == logits2.shape and out2.dtype == logits2.dtype
    assert jnp.max(jnp.abs(out2 - ref2)) < 1e-5

    # Ragged F but flat count divisible by 128 -> lane-dense flatten path.
    logits3 = jax.random.normal(k3, (6, 192), dtype=jnp.float32)
    out3 = jax.block_until_ready(numerical_activation(logits3))
    ref3 = jax.nn.sigmoid(logits3)
    assert out3.shape == logits3.shape and out3.dtype == logits3.dtype
    assert jnp.max(jnp.abs(out3 - ref3)) < 1e-5

    # bf16 inputs: f32 internal math, cast only at the store.
    logits4 = jax.random.normal(k4, (8, 256), dtype=jnp.bfloat16)
    out4 = jax.block_until_ready(numerical_activation(logits4))
    ref4 = jax.nn.sigmoid(logits4.astype(jnp.float32)).astype(jnp.bfloat16)
    assert out4.shape == logits4.shape and out4.dtype == logits4.dtype
    assert jnp.max(jnp.abs(out4.astype(jnp.float32) - ref4.astype(jnp.float32))) < 1e-2

    print("KERNEL_OK")
</pallas_src>

<mosaic_0001>
module attributes {stable_mosaic.version = 11 : i64} {
  func.func @_sigmoid_kernel(%arg0: i32, %arg1: i32, %arg2: memref<8x256xf32, #tpu.memory_space<vmem>>, %arg3: memref<8x256xf32, #tpu.memory_space<vmem>>) attributes {dimension_semantics = [#tpu.dimension_semantics<parallel>, #tpu.dimension_semantics<parallel>], iteration_bounds = array<i64: 1, 1>, scalar_prefetch = 0 : i64, scratch_operands = 0 : i64, tpu.core_type = #tpu.core_type<tc>, window_params = [{transform_indices = @transform_0, window_bounds = array<i64: 8, 256>}, {transform_indices = @transform_1, window_bounds = array<i64: 8, 256>}]} {
    %c0 = arith.constant 0 : index
    %c0_0 = arith.constant 0 : index
    %0 = vector.load %arg2[%c0, %c0_0] : memref<8x256xf32, #tpu.memory_space<vmem>>, vector<8x256xf32>
    %cst = arith.constant 5.000000e-01 : f32
    %1 = vector.broadcast %cst : f32 to vector<8x256xf32>
    %2 = arith.mulf %1, %0 : vector<8x256xf32>
    %3 = math.tanh %2 : vector<8x256xf32>
    %cst_1 = arith.constant 1.000000e+00 : f32
    %4 = vector.broadcast %cst_1 : f32 to vector<8x256xf32>
    %5 = arith.addf %3, %4 : vector<8x256xf32>
    %cst_2 = arith.constant 5.000000e-01 : f32
    %6 = vector.broadcast %cst_2 : f32 to vector<8x256xf32>
    %7 = arith.mulf %6, %5 : vector<8x256xf32>
    %c0_3 = arith.constant 0 : index
    %c0_4 = arith.constant 0 : index
    %8 = vector.load %arg3[%c0_3, %c0_4] : memref<8x256xf32, #tpu.memory_space<vmem>>, vector<8x256xf32>
    tpu.vector_store %arg3[%c0_3, %c0_4], %7 {strides = array<i32>} : memref<8x256xf32, #tpu.memory_space<vmem>>, vector<8x256xf32>,
    return
  }
  func.func @transform_0(%arg0: i32, %arg1: i32) -> (i32, i32) {
    %c0_i32 = arith.constant 0 : i32
    return %arg0, %arg1 : i32, i32
  }
  func.func @transform_1(%arg0: i32, %arg1: i32) -> (i32, i32) {
    %c0_i32 = arith.constant 0 : i32
    return %arg0, %arg1 : i32, i32
  }
}

</mosaic_0001>

<llo_original>
// kernel: tpu_custom_call.1
$region0: #{tpu_custom_call.1}
  #allocation0 [shape = 'u32[]', space=smem, size = 0x4, offset = 0x4, fixed_abs, tag = 'smem constant byte address 0x4 - core index']
  #allocation1 [shape = 'u32[144,128]{1,0:T(1,128)}', space=vmem, size = 0x12000, scoped, tag = 'internal scratch']
  %s0 = inlined_call_operand.hbm [shape: f32[8,256], index: 0, kind: input, shape index: {}]
  %s1 = inlined_call_operand.hbm [shape: f32[8,256], index: 1, kind: output, shape index: {}]
  %s2 = sld [smem:[#allocation0]]
  $region18: #{tpu_custom_call.1} parent=0
    _
  %s4 = ssub.s32 1, %s2
  %s5 = scalar_select 0, %s4, %s2
  $region1: #{tpu_custom_call.1} parent=0
    #allocation2 [shape = 'u8[8192]{0}', space=vmem, size = 0x2000, scoped, tag = 'input window, operand 0, single buffered']
    #allocation3 [shape = 's32[1]{0}', space=sflag, size = 0x4, scoped, tag = 'scoped memory for tpu_custom_call.1']
    #allocation4 [shape = 's32[1]{0}', space=sflag, size = 0x4, scoped, tag = 'scoped memory for tpu_custom_call.1']
    #allocation5 [shape = 'u8[8192]{0}', space=vmem, size = 0x2000, scoped, tag = 'output window, operand 0, single buffered']
    %6 = vsyncpa [#allocation3], 0
    %7 = vsyncpa [#allocation4], 0
    // Predicated region
    $region2: #{tpu_custom_call.1} parent=1 // pred_check
      _
    $region3: #{tpu_custom_call.1} parent=1 // pred_check_branch
      %9 = sbr.rel (0) target = $region5
    $region4: #{tpu_custom_call.1} parent=1 // pred_region
      %s11 = ssub.s32 256, 256
      %12 = vsyncadd [#allocation3], %s11
      %s14 = sshll.u32 [#allocation2], 4
      %s15 = int_to_ptr.vmem [resolvable:$true] %s14
      %17 = dma.hbm_to_vmem [thread:$0]  %s0, 256, %s15, [#allocation3]
    $region5: #{tpu_custom_call.1} parent=1 // pred_fallthru
      _
    // Predicated region
    $region6: #{tpu_custom_call.1} parent=1 // pred_check
      _
    $region7: #{tpu_custom_call.1} parent=1 // pred_check_branch
      %19 = sbr.rel (0) target = $region9
    $region8: #{tpu_custom_call.1} parent=1 // pred_region
      %20 = dma.done [#allocation3], 256
    $region9: #{tpu_custom_call.1} parent=1 // pred_fallthru
      _
    %v21 = vld [vmem:[#allocation2] sm:$0xff]
    %v22 = vld [vmem:[#allocation2 + $0x8] sm:$0xff]
    %v23 = vmul.f32 %v21, 0.5
    %v24 = vmul.f32 %v22, 0.5
    %v25 = vtanh.pop %v23
    %v26 = vtanh.pop %v24
    %v27 = vadd.f32 %v25, 1.0
    %v28 = vadd.f32 %v26, 1.0
    %v29 = vmul.f32 %v27, 0.5
    %v30 = vmul.f32 %v28, 0.5
    %31 = vst [vmem:[#allocation5] sm:$0xff] %v29
    %32 = vst [vmem:[#allocation5 + $0x8] sm:$0xff] %v30
    // Predicated region
    $region10: #{tpu_custom_call.1} parent=1 // pred_check
      _
    $region11: #{tpu_custom_call.1} parent=1 // pred_check_branch
      %34 = sbr.rel (0) target = $region13
    $region12: #{tpu_custom_call.1} parent=1 // pred_region
      %s36 = ssub.s32 256, 256
      %37 = vsyncadd [#allocation4], %s36
      %s39 = sshll.u32 [#allocation5], 4
      %s40 = int_to_ptr.vmem [resolvable:$true] %s39
      %42 = dma.vmem_to_hbm [thread:$0]  %s40, 256, %s1, [#allocation4]
    $region13: #{tpu_custom_call.1} parent=1 // pred_fallthru
      _
    // Predicated region
    $region14: #{tpu_custom_call.1} parent=1 // pred_check
      _
    $region15: #{tpu_custom_call.1} parent=1 // pred_check_branch
      %44 = sbr.rel (0) target = $region17
    $region16: #{tpu_custom_call.1} parent=1 // pred_region
      %45 = dma.done [#allocation4], 256
    $region17: #{tpu_custom_call.1} parent=1 // pred_fallthru
      _
    %46 = vsyncpa [#allocation3], 1
    %47 = vsyncpa [#allocation4], 1

</llo_original>
